<compile_context>
chip_gen: v6e
topology: v6e:2x2x1
jax: 0.10.0
libtpu: 0.0.40
codegen_flags: <defaults>
</compile_context>

<pallas_src>
import jax
import jax.numpy as jnp
from jax.experimental import pallas as pl
from jax.experimental.pallas import tpu as pltpu

# ---------------------------------------------------------------------------
# Problem sizes (small, consistent with the module's forward)
# ---------------------------------------------------------------------------
STATE_DIM = 16
ACTION_DIM = 16
EMBED_DIM = 32
IN_DIM = STATE_DIM + ACTION_DIM          # 32
FUSED_OUT = 2 * EMBED_DIM                # 64


def _inner_product_kernel(x_ref, w_ref, b_ref, o_ref):
    # One fused matmul: emb = [state_emb | action_emb]  -> (TB, 2*EMBED_DIM)
    emb = jnp.dot(x_ref[...], w_ref[...],
                  preferred_element_type=jnp.float32) + b_ref[...]
    state_emb = emb[:, :EMBED_DIM]
    action_emb = emb[:, EMBED_DIM:]
    # Row-wise inner product (torch.bmm((B,1,E),(B,E,1)).squeeze(2)) -> (TB, 1)
    o_ref[...] = jnp.sum(state_emb * action_emb, axis=-1, keepdims=True)


def parametric_inner_product(x, w_state, b_state, w_action, b_action,
                             *, tile_b=None):
    """x: (B, state_dim + action_dim) f32 -> (B, 1) f32."""
    B, in_dim = x.shape
    assert in_dim == IN_DIM, (in_dim, IN_DIM)

    # --- fuse the two Linears into one block-diagonal weight (wrapper-side) ---
    w_blk = jnp.zeros((IN_DIM, FUSED_OUT), dtype=x.dtype)
    w_blk = w_blk.at[:STATE_DIM, :EMBED_DIM].set(w_state)
    w_blk = w_blk.at[STATE_DIM:, EMBED_DIM:].set(w_action)
    b_cat = jnp.concatenate([b_state, b_action], axis=-1)     # (1, 2*EMBED_DIM)

    # --- pick a batch tile and pad the batch to a multiple of it -------------
    if tile_b is None:
        tile_b = min(B, 1024)
    tile_b = min(tile_b, B)
    if tile_b < B:
        # tiled blocks must have a sublane-aligned (multiple of 8) batch dim
        tile_b = max(8, (tile_b // 8) * 8)
    padded_b = pl.cdiv(B, tile_b) * tile_b
    if padded_b != B:
        x = jnp.pad(x, ((0, padded_b - B), (0, 0)))
    num_tiles = padded_b // tile_b

    out = pl.pallas_call(
        _inner_product_kernel,
        out_shape=jax.ShapeDtypeStruct((padded_b, 1), jnp.float32),
        grid=(num_tiles,),
        in_specs=[
            # batch tile marches with the grid
            pl.BlockSpec((tile_b, IN_DIM), lambda i: (i, 0)),
            # fused weight / bias stay resident (constant block index)
            pl.BlockSpec((IN_DIM, FUSED_OUT), lambda i: (0, 0)),
            pl.BlockSpec((1, FUSED_OUT), lambda i: (0, 0)),
        ],
        out_specs=pl.BlockSpec((tile_b, 1), lambda i: (i, 0)),
        compiler_params=pltpu.CompilerParams(
            dimension_semantics=("parallel",)),  # lets v7x use both TCs
    )(x, w_blk, b_cat)

    return out[:B]


def _reference(x, w_state, b_state, w_action, b_action):
    states = x[:, :STATE_DIM]
    actions = x[:, STATE_DIM:]
    se = states @ w_state + b_state
    ae = actions @ w_action + b_action
    return jnp.sum(se * ae, axis=-1, keepdims=True)


if __name__ == "__main__":
    key = jax.random.PRNGKey(0)
    kx, kws, kbs, kwa, kba = jax.random.split(key, 5)

    # Deterministic synthetic sub-model parameters.
    w_state = 0.1 * jax.random.normal(kws, (STATE_DIM, EMBED_DIM), jnp.float32)
    b_state = 0.1 * jax.random.normal(kbs, (1, EMBED_DIM), jnp.float32)
    w_action = 0.1 * jax.random.normal(kwa, (ACTION_DIM, EMBED_DIM), jnp.float32)
    b_action = 0.1 * jax.random.normal(kba, (1, EMBED_DIM), jnp.float32)

    # Case 1: batch that exercises a real grid (2 tiles of 128 rows).
    BATCH = 256
    x = jax.random.normal(kx, (BATCH, IN_DIM), dtype=jnp.float32)
    out = parametric_inner_product(x, w_state, b_state, w_action, b_action,
                                   tile_b=128)
    out = jax.block_until_ready(out)
    ref = _reference(x, w_state, b_state, w_action, b_action)
    assert out.shape == (BATCH, 1), out.shape
    assert jnp.allclose(out, ref, atol=1e-4, rtol=1e-4)

    # Case 2: small, non-tile-aligned batch (pads to 16, grid of 2).
    x_small = x[:10]
    out_small = parametric_inner_product(
        x_small, w_state, b_state, w_action, b_action, tile_b=8)
    out_small = jax.block_until_ready(out_small)
    ref_small = _reference(x_small, w_state, b_state, w_action, b_action)
    assert out_small.shape == (10, 1), out_small.shape
    assert jnp.allclose(out_small, ref_small, atol=1e-4, rtol=1e-4)

    print("KERNEL_OK")
</pallas_src>

<mosaic_0001>
module attributes {stable_mosaic.version = 11 : i64} {
  func.func @_inner_product_kernel(%arg0: i32, %arg1: memref<128x32xf32, #tpu.memory_space<vmem>>, %arg2: memref<32x64xf32, #tpu.memory_space<vmem>>, %arg3: memref<1x64xf32, #tpu.memory_space<vmem>>, %arg4: memref<128x1xf32, #tpu.memory_space<vmem>>) attributes {dimension_semantics = [#tpu.dimension_semantics<parallel>], iteration_bounds = array<i64: 2>, scalar_prefetch = 0 : i64, scratch_operands = 0 : i64, tpu.core_type = #tpu.core_type<tc>, window_params = [{transform_indices = @transform_0, window_bounds = array<i64: 128, 32>}, {pipeline_mode = #tpu.pipeline_mode<synchronous>, transform_indices = @transform_1, window_bounds = array<i64: 32, 64>}, {pipeline_mode = #tpu.pipeline_mode<synchronous>, transform_indices = @transform_2, window_bounds = array<i64: 1, 64>}, {transform_indices = @transform_3, window_bounds = array<i64: 128, 1>}]} {
    %c0 = arith.constant 0 : index
    %c0_0 = arith.constant 0 : index
    %0 = vector.load %arg1[%c0, %c0_0] : memref<128x32xf32, #tpu.memory_space<vmem>>, vector<128x32xf32>
    %c0_1 = arith.constant 0 : index
    %c0_2 = arith.constant 0 : index
    %1 = vector.load %arg2[%c0_1, %c0_2] : memref<32x64xf32, #tpu.memory_space<vmem>>, vector<32x64xf32>
    %cst = arith.constant dense<0.000000e+00> : vector<128x64xf32>
    %2 = tpu.matmul %0, %1, %cst {dimension_numbers = #tpu.dot_dimension_numbers<[1], [0], [0], [1], [0, 0, 1, 1], [], []>} : vector<128x32xf32>, vector<32x64xf32>, vector<128x64xf32> -> vector<128x64xf32>
    %c0_3 = arith.constant 0 : index
    %c0_4 = arith.constant 0 : index
    %3 = vector.load %arg3[%c0_3, %c0_4] : memref<1x64xf32, #tpu.memory_space<vmem>>, vector<1x64xf32>
    %4 = vector.broadcast %3 : vector<1x64xf32> to vector<128x64xf32>
    %5 = arith.addf %2, %4 : vector<128x64xf32>
    %6 = vector.extract_strided_slice %5 {offsets = [0, 0], sizes = [128, 32], strides = [1, 1]} : vector<128x64xf32> to vector<128x32xf32>
    %7 = vector.extract_strided_slice %5 {offsets = [0, 32], sizes = [128, 32], strides = [1, 1]} : vector<128x64xf32> to vector<128x32xf32>
    %8 = arith.mulf %6, %7 : vector<128x32xf32>
    %cst_5 = arith.constant dense<0.000000e+00> : vector<128xf32>
    %9 = vector.multi_reduction <add>, %8, %cst_5 [1] : vector<128x32xf32> to vector<128xf32>
    %10 = vector.shape_cast %9 : vector<128xf32> to vector<128x1xf32>
    %c0_6 = arith.constant 0 : index
    %c0_7 = arith.constant 0 : index
    %11 = vector.load %arg4[%c0_6, %c0_7] : memref<128x1xf32, #tpu.memory_space<vmem>>, vector<128x1xf32>
    tpu.vector_store %arg4[%c0_6, %c0_7], %10 {strides = array<i32>} : memref<128x1xf32, #tpu.memory_space<vmem>>, vector<128x1xf32>,
    return
  }
  func.func @transform_0(%arg0: i32) -> (i32, i32) {
    %c0_i32 = arith.constant 0 : i32
    %c0_i32_0 = arith.constant 0 : i32
    return %arg0, %c0_i32 : i32, i32
  }
  func.func @transform_1(%arg0: i32) -> (i32, i32) {
    %c0_i32 = arith.constant 0 : i32
    %c0_i32_0 = arith.constant 0 : i32
    %c0_i32_1 = arith.constant 0 : i32
    return %c0_i32, %c0_i32_0 : i32, i32
  }
  func.func @transform_2(%arg0: i32) -> (i32, i32) {
    %c0_i32 = arith.constant 0 : i32
    %c0_i32_0 = arith.constant 0 : i32
    %c0_i32_1 = arith.constant 0 : i32
    return %c0_i32, %c0_i32_0 : i32, i32
  }
  func.func @transform_3(%arg0: i32) -> (i32, i32) {
    %c0_i32 = arith.constant 0 : i32
    %c0_i32_0 = arith.constant 0 : i32
    return %arg0, %c0_i32 : i32, i32
  }
}

</mosaic_0001>

<llo_original>
// kernel: tpu_custom_call.1
$region0: #{tpu_custom_call.1}
  #allocation0 [shape = 'u32[]', space=smem, size = 0x4, offset = 0x4, fixed_abs, tag = 'smem constant byte address 0x4 - core index']
  #allocation1 [shape = 'u32[144,128]{1,0:T(1,128)}', space=vmem, size = 0x12000, scoped, tag = 'internal scratch']
  %s0 = inlined_call_operand.vmem [shape: f32[256,32], index: 0, kind: input, shape index: {}]
  %s1 = inlined_call_operand.vmem [shape: f32[32,64], index: 1, kind: input, shape index: {}]
  %s2 = inlined_call_operand.vmem [shape: f32[1,64], index: 2, kind: input, shape index: {}]
  %s3 = inlined_call_operand.vmem [shape: f32[256,1], index: 3, kind: output, shape index: {}]
  %s4 = sld [smem:[#allocation0]]
  $region45: #{tpu_custom_call.1} parent=0
    _
  %s6 = ssub.s32 1, %s4
  %s7 = scalar_select 0, %s6, %s4
  loop: start=0, step=1, limit=4
  $region2: #{tpu_custom_call.1} parent=0 // loop_pre_header
    _
  $region3: #{tpu_custom_call.1} parent=0 // loop_header
    %s9 = sphi 0, %s13
    %p10 = scmp.ge.s32.totalorder %s9, 4
    %s19 = sphi 0, %s21
    %s22 = sphi 0, %s19
    %s23 = sphi 0, %s22
    %s39 = sphi 0, %s23
    %s43 = sphi 0, %s43
    %s45 = sphi 0, %s43
    %s46 = sphi 0, %s45
    %s60 = sphi 0, %s46
    %s64 = sphi 0, %s64
    %s66 = sphi 0, %s64
    %s67 = sphi 0, %s66
    %s81 = sphi 0, %s67
    %s87 = sphi 0, %s89
    %s90 = sphi 0, %s87
    %s91 = sphi 0, %s90
    %s107 = sphi 0, %s91
  $region4: #{tpu_custom_call.1} parent=0 // loop_header_branch
    %12 = sbr.rel (%p10) target = $region8
  $region5: #{tpu_custom_call.1} parent=0 // loop_body
    %s14 = ssub.s32 %s9, 1
    %s15 = ssub.s32 %s9, 2
    %s16 = sadd.s32 %s9, 1
    %s17 = ssub.s32 %s9, %s16
    %p18 = scmp.eq.s32.totalorder %s17, 0
    %s20 = sadd.s32 %s19, 1
    %s21 = scalar_select %p18, %s19, %s20
    %p24 = pneg %p18
    %p25 = scmp.eq.s32.totalorder %s9, 1
    %p26 = por %p24, %p25
    %p27 = scmp.ne.s32.totalorder %s19, %s22
    %p28 = scmp.eq.s32.totalorder %s9, 0
    %p29 = por %p27, %p28
    %p30 = scmp.ne.s32.totalorder %s19, %s22
    %p31 = scmp.eq.s32.totalorder %s14, 1
    %p32 = por %p30, %p31
    %p33 = scmp.ne.s32.totalorder %s22, %s23
    %p34 = scmp.eq.s32.totalorder %s14, 0
    %p35 = por %p33, %p34
    %p36 = scmp.ne.s32.totalorder %s22, %s23
    %p37 = scmp.eq.s32.totalorder %s15, 1
    %p38 = por %p36, %p37
    %p40 = scmp.ne.s32.totalorder %s23, %s39
    %p41 = scmp.eq.s32.totalorder %s15, 0
    %p42 = por %p40, %p41
    %s44 = sadd.s32 %s43, 1
    %p47 = scmp.eq.s32.totalorder %s9, 1
    %p48 = scmp.ne.s32.totalorder %s43, %s45
    %p49 = scmp.eq.s32.totalorder %s9, 0
    %p50 = por %p48, %p49
    %p51 = scmp.ne.s32.totalorder %s43, %s45
    %p52 = scmp.eq.s32.totalorder %s14, 1
    %p53 = por %p51, %p52
    %p54 = scmp.ne.s32.totalorder %s45, %s46
    %p55 = scmp.eq.s32.totalorder %s14, 0
    %p56 = por %p54, %p55
    %p57 = scmp.ne.s32.totalorder %s45, %s46
    %p58 = scmp.eq.s32.totalorder %s15, 1
    %p59 = por %p57, %p58
    %p61 = scmp.ne.s32.totalorder %s46, %s60
    %p62 = scmp.eq.s32.totalorder %s15, 0
    %p63 = por %p61, %p62
    %s65 = sadd.s32 %s64, 1
    %p68 = scmp.eq.s32.totalorder %s9, 1
    %p69 = scmp.ne.s32.totalorder %s64, %s66
    %p70 = scmp.eq.s32.totalorder %s9, 0
    %p71 = por %p69, %p70
    %p72 = scmp.ne.s32.totalorder %s64, %s66
    %p73 = scmp.eq.s32.totalorder %s14, 1
    %p74 = por %p72, %p73
    %p75 = scmp.ne.s32.totalorder %s66, %s67
    %p76 = scmp.eq.s32.totalorder %s14, 0
    %p77 = por %p75, %p76
    %p78 = scmp.ne.s32.totalorder %s66, %s67
    %p79 = scmp.eq.s32.totalorder %s15, 1
    %p80 = por %p78, %p79
    %p82 = scmp.ne.s32.totalorder %s67, %s81
    %p83 = scmp.eq.s32.totalorder %s15, 0
    %p84 = por %p82, %p83
    %s85 = ssub.s32 %s9, %s16
    %p86 = scmp.eq.s32.totalorder %s85, 0
    %s88 = sadd.s32 %s87, 1
    %s89 = scalar_select %p86, %s87, %s88
    %p92 = pneg %p86
    %p93 = scmp.eq.s32.totalorder %s9, 1
    %p94 = por %p92, %p93
    %p95 = scmp.ne.s32.totalorder %s87, %s90
    %p96 = scmp.eq.s32.totalorder %s9, 0
    %p97 = por %p95, %p96
    %p98 = scmp.ne.s32.totalorder %s87, %s90
    %p99 = scmp.eq.s32.totalorder %s14, 1
    %p100 = por %p98, %p99
    %p101 = scmp.ne.s32.totalorder %s90, %s91
    %p102 = scmp.eq.s32.totalorder %s14, 0
    %p103 = por %p101, %p102
    %p104 = scmp.ne.s32.totalorder %s90, %s91
    %p105 = scmp.eq.s32.totalorder %s15, 1
    %p106 = por %p104, %p105
    %p108 = scmp.ne.s32.totalorder %s91, %s107
    %p109 = scmp.eq.s32.totalorder %s15, 0
    %p110 = por %p108, %p109
    %p111 = scmp.le.s32.totalorder 1, %s9
    %p112 = scmp.lt.s32.totalorder %s9, 3
    %p113 = pnand %p111, %p112
    %p114 = pneg %p113
    // Predicated region
    $region9: #{tpu_custom_call.1} parent=5 // pred_check
      _
    $region10: #{tpu_custom_call.1} parent=5 // pred_check_branch
      %116 = sbr.rel (%p113) target = $region12
    $region11: #{tpu_custom_call.1} parent=5 // pred_region
      %s117 = ssub.s32 %s9, 1
      // Predicated region
      $region13: #{tpu_custom_call.1} parent=11 // pred_check
        %p118 = pneg %p56
      $region14: #{tpu_custom_call.1} parent=11 // pred_check_branch
        %120 = sbr.rel (%p118) target = $region16
      $region15: #{tpu_custom_call.1} parent=11 // pred_region
        _
      $region16: #{tpu_custom_call.1} parent=11 // pred_fallthru
        _
      // Predicated region
      $region17: #{tpu_custom_call.1} parent=11 // pred_check
        %p121 = pneg %p77
      $region18: #{tpu_custom_call.1} parent=11 // pred_check_branch
        %123 = sbr.rel (%p121) target = $region20
      $region19: #{tpu_custom_call.1} parent=11 // pred_region
        _
      $region20: #{tpu_custom_call.1} parent=11 // pred_fallthru
        _
    $region12: #{tpu_custom_call.1} parent=5 // pred_fallthru
      _
    %p124 = scmp.lt.s32.totalorder %s9, 2
    // Predicated region
    $region21: #{tpu_custom_call.1} parent=5 // pred_check
      %p125 = pneg %p124
    $region22: #{tpu_custom_call.1} parent=5 // pred_check_branch
      %127 = sbr.rel (%p125) target = $region24
    $region23: #{tpu_custom_call.1} parent=5 // pred_region
      // Predicated region
      $region25: #{tpu_custom_call.1} parent=23 // pred_check
        %p128 = pneg %p29
      $region26: #{tpu_custom_call.1} parent=23 // pred_check_branch
        %130 = sbr.rel (%p128) target = $region28
      $region27: #{tpu_custom_call.1} parent=23 // pred_region
        %s131 = smul.u32 16, %s9
        %p132 = scmp.lt.s32.totalorder %s131, 31
        %s133 = scalar_select %p132, %s131, 31
        %s134 = smul.addr %s133, 8
        %s135 = scalar_lea.vmem %s0, %s134
        %s136 = smul.u32 16, %s9
      $region28: #{tpu_custom_call.1} parent=23 // pred_fallthru
        _
    $region24: #{tpu_custom_call.1} parent=5 // pred_fallthru
      _
    %p137 = scmp.le.s32.totalorder 1, %s9
    %p138 = scmp.lt.s32.totalorder %s9, 3
    %p139 = pnand %p137, %p138
    %p140 = pneg %p139
    // Predicated region
    $region29: #{tpu_custom_call.1} parent=5 // pred_check
      _
    $region30: #{tpu_custom_call.1} parent=5 // pred_check_branch
      %142 = sbr.rel (%p139) target = $region32
    $region31: #{tpu_custom_call.1} parent=5 // pred_region
      %s143 = ssub.s32 %s9, 1
      %s144 = smul.u32 16, %s14
      %p145 = scmp.lt.s32.totalorder %s144, 31
      %s146 = scalar_select %p145, %s144, 31
      %s147 = smul.addr %s146, 8
      %s148 = scalar_lea.vmem %s0, %s147
      %p149 = pneg %p35
      %p150 = pneg %p32
      %p151 = pneg %p56
      %p152 = pneg %p53
      %p153 = pneg %p77
      %p154 = pneg %p74
      %p155 = pneg %p103
      %p156 = pneg %p100
      %s157 = smul.u32 16, %s14
      %p158 = scmp.lt.s32.totalorder %s157, 31
      %s159 = scalar_select %p158, %s157, 31
      %s160 = smul.addr %s159, 8
      %s161 = scalar_lea.vmem %s3, %s160
      %s162 = smul.u32 16, %s14
      %p163 = scmp.lt.s32.totalorder %s162, 31
      %s164 = scalar_select %p163, %s162, 31
      %s165 = smul.addr %s164, 8
      %s166 = scalar_lea.vmem %s0, %s165
      %s167 = smul.u32 16, %s14
      %s168 = smul.u32 16, %s14
      %p169 = scmp.lt.s32.totalorder %s168, 31
      %s170 = scalar_select %p169, %s168, 31
      %s171 = smul.addr %s170, 8
      %s172 = scalar_lea.vmem %s3, %s171
      %s173 = smul.u32 16, %s14
      %v174 = vld [vmem:[%s166] sm:$0xff]
      %v175 = vld [vmem:[%s166 + $0x8] sm:$0xff]
      %v176 = vld [vmem:[%s166 + $0x10] sm:$0xff]
      %v177 = vld [vmem:[%s166 + $0x18] sm:$0xff]
      %v178 = vld [vmem:[%s166 + $0x20] sm:$0xff]
      %v179 = vld [vmem:[%s166 + $0x28] sm:$0xff]
      %v180 = vld [vmem:[%s166 + $0x30] sm:$0xff]
      %v181 = vld [vmem:[%s166 + $0x38] sm:$0xff]
      %v182 = vld [vmem:[%s166 + $0x40] sm:$0xff]
      %v183 = vld [vmem:[%s166 + $0x48] sm:$0xff]
      %v184 = vld [vmem:[%s166 + $0x50] sm:$0xff]
      %v185 = vld [vmem:[%s166 + $0x58] sm:$0xff]
      %v186 = vld [vmem:[%s166 + $0x60] sm:$0xff]
      %v187 = vld [vmem:[%s166 + $0x68] sm:$0xff]
      %v188 = vld [vmem:[%s166 + $0x70] sm:$0xff]
      %v189 = vld [vmem:[%s166 + $0x78] sm:$0xff]
      %v190 = vld [vmem:[%s1] sm:$0xff]
      %v191 = vld [vmem:[%s1 + $0x8] sm:$0xff]
      %v192 = vld [vmem:[%s1 + $0x10] sm:$0xff]
      %v193 = vld [vmem:[%s1 + $0x18] sm:$0xff]
      %v194 = vld [vmem:[%s2] sm:$0x1]
      %v196 = vlaneseq
      %v197 = vshrl.u32 %v196, 7
      %v198 = vsub.s32 0, %v197
      %v199 = vrot.slane %v194, %v198
      %vm201 = vcmask 261120
      %v203 = vsel %vm201, %v174, 0
      %v206 = vsel %vm201, %v175, 0
      %v209 = vsel %vm201, %v176, 0
      %v212 = vsel %vm201, %v177, 0
      %v215 = vsel %vm201, %v178, 0
      %v218 = vsel %vm201, %v179, 0
      %v221 = vsel %vm201, %v180, 0
      %v224 = vsel %vm201, %v181, 0
      %v227 = vsel %vm201, %v182, 0
      %v230 = vsel %vm201, %v183, 0
      %v233 = vsel %vm201, %v184, 0
      %v236 = vsel %vm201, %v185, 0
      %v239 = vsel %vm201, %v186, 0
      %v242 = vsel %vm201, %v187, 0
      %v245 = vsel %vm201, %v188, 0
      %v248 = vsel %vm201, %v189, 0
      %250 = vmatprep.subr.mxu0 0.0
      %251 = vmatpush1.msra.mxu0 0.0
      %252 = vmatprep.subr.mxu0 0.0
      %253 = vmatpush1.msra.mxu0 0.0
      %254 = vmatprep.subr.mxu0 0.0
      %255 = vmatpush1.msra.mxu0 0.0
      %256 = vmatprep.subr.mxu0 0.0
      %257 = vmatpush1.msra.mxu0 0.0
      %258 = vmatprep.subr.mxu0 0.0
      %259 = vmatpush1.msra.mxu0 0.0
      %260 = vmatprep.subr.mxu0 0.0
      %261 = vmatpush1.msra.mxu0 0.0
      %262 = vmatprep.subr.mxu0 0.0
      %263 = vmatpush1.msra.mxu0 0.0
      %264 = vmatprep.subr.mxu0 0.0
      %265 = vmatpush1.msra.mxu0 0.0
      %266 = vmatprep.subr.mxu0 0.0
      %267 = vmatpush1.msra.mxu0 0.0
      %268 = vmatprep.subr.mxu0 0.0
      %269 = vmatpush1.msra.mxu0 0.0
      %270 = vmatprep.subr.mxu0 0.0
      %271 = vmatpush1.msra.mxu0 0.0
      %272 = vmatprep.subr.mxu0 0.0
      %273 = vmatpush1.msra.mxu0 0.0
      %274 = vmatprep.subr.mxu0 0.0
      %275 = vmatpush1.msra.mxu0 %v193
      %276 = vmatprep.subr.mxu0 0.0
      %277 = vmatpush1.msra.mxu0 %v192
      %278 = vmatprep.subr.mxu0 0.0
      %279 = vmatpush1.msra.mxu0 %v191
      %280 = vmatprep.subr.mxu0 0.0
      %281 = vmatpush1.msra.mxu0 %v190
      %282 = vmatprep.subr.mxu0 0.0
      %283 = vmatpush2.msra.mxu0 0.0
      %284 = vmatprep.subr.mxu0 0.0
      %285 = vmatpush2.msra.mxu0 0.0
      %286 = vmatprep.subr.mxu0 0.0
      %287 = vmatpush2.msra.mxu0 0.0
      %288 = vmatprep.subr.mxu0 0.0
      %289 = vmatpush2.msra.mxu0 0.0
      %290 = vmatprep.subr.mxu0 0.0
      %291 = vmatpush2.msra.mxu0 0.0
      %292 = vmatprep.subr.mxu0 0.0
      %293 = vmatpush2.msra.mxu0 0.0
      %294 = vmatprep.subr.mxu0 0.0
      %295 = vmatpush2.msra.mxu0 0.0
      %296 = vmatprep.subr.mxu0 0.0
      %297 = vmatpush2.msra.mxu0 0.0
      %298 = vmatprep.subr.mxu0 0.0
      %299 = vmatpush2.msra.mxu0 0.0
      %300 = vmatprep.subr.mxu0 0.0
      %301 = vmatpush2.msra.mxu0 0.0
      %302 = vmatprep.subr.mxu0 0.0
      %303 = vmatpush2.msra.mxu0 0.0
      %304 = vmatprep.subr.mxu0 0.0
      %305 = vmatpush2.msra.mxu0 0.0
      %306 = vmatprep.subr.mxu0 0.0
      %307 = vmatpush2.msra.mxu0 0.0
      %308 = vmatprep.subr.mxu0 0.0
      %309 = vmatpush2.msra.mxu0 0.0
      %310 = vmatprep.subr.mxu0 0.0
      %311 = vmatpush2.msra.mxu0 0.0
      %312 = vmatprep.subr.mxu0 0.0
      %313 = vmatpush2.msra.mxu0 0.0
      %314 = vmatprep.mubr.f32.mxu0 0.0
      %315 = vmatmul.mubr.f32.gmra.mxu0 %v203
      %v316 = vpop.f32.mrf.mxu0
      %v317 = vadd.f32 %v199, %v316
      %v318 = vpop.f32.mrf.mxu0
      %319 = vmatprep.mubr.f32.mxu0 0.0
      %320 = vmatmul.mubr.f32.gmra.mxu0 %v206
      %v321 = vpop.f32.mrf.mxu0
      %v322 = vadd.f32 %v199, %v321
      %v323 = vpop.f32.mrf.mxu0
      %324 = vmatprep.mubr.f32.mxu0 0.0
      %325 = vmatmul.mubr.f32.gmra.mxu0 %v209
      %v326 = vpop.f32.mrf.mxu0
      %v327 = vadd.f32 %v199, %v326
      %v328 = vpop.f32.mrf.mxu0
      %329 = vmatprep.mubr.f32.mxu0 0.0
      %330 = vmatmul.mubr.f32.gmra.mxu0 %v212
      %v331 = vpop.f32.mrf.mxu0
      %v332 = vadd.f32 %v199, %v331
      %v333 = vpop.f32.mrf.mxu0
      %334 = vmatprep.mubr.f32.mxu0 0.0
      %335 = vmatmul.mubr.f32.gmra.mxu0 %v215
      %v336 = vpop.f32.mrf.mxu0
      %v337 = vadd.f32 %v199, %v336
      %v338 = vpop.f32.mrf.mxu0
      %339 = vmatprep.mubr.f32.mxu0 0.0
      %340 = vmatmul.mubr.f32.gmra.mxu0 %v218
      %v341 = vpop.f32.mrf.mxu0
      %v342 = vadd.f32 %v199, %v341
      %v343 = vpop.f32.mrf.mxu0
      %344 = vmatprep.mubr.f32.mxu0 0.0
      %345 = vmatmul.mubr.f32.gmra.mxu0 %v221
      %v346 = vpop.f32.mrf.mxu0
      %v347 = vadd.f32 %v199, %v346
      %v348 = vpop.f32.mrf.mxu0
      %349 = vmatprep.mubr.f32.mxu0 0.0
      %350 = vmatmul.mubr.f32.gmra.mxu0 %v224
      %v351 = vpop.f32.mrf.mxu0
      %v352 = vadd.f32 %v199, %v351
      %v353 = vpop.f32.mrf.mxu0
      %354 = vmatprep.mubr.f32.mxu0 0.0
      %355 = vmatmul.mubr.f32.gmra.mxu0 %v227
      %v356 = vpop.f32.mrf.mxu0
      %v357 = vadd.f32 %v199, %v356
      %v358 = vpop.f32.mrf.mxu0
      %359 = vmatprep.mubr.f32.mxu0 0.0
      %360 = vmatmul.mubr.f32.gmra.mxu0 %v230
      %v361 = vpop.f32.mrf.mxu0
      %v362 = vadd.f32 %v199, %v361
      %v363 = vpop.f32.mrf.mxu0
      %364 = vmatprep.mubr.f32.mxu0 0.0
      %365 = vmatmul.mubr.f32.gmra.mxu0 %v233
      %v366 = vpop.f32.mrf.mxu0
      %v367 = vadd.f32 %v199, %v366
      %v368 = vpop.f32.mrf.mxu0
      %369 = vmatprep.mubr.f32.mxu0 0.0
      %370 = vmatmul.mubr.f32.gmra.mxu0 %v236
      %v371 = vpop.f32.mrf.mxu0
      %v372 = vadd.f32 %v199, %v371
      %v373 = vpop.f32.mrf.mxu0
      %374 = vmatprep.mubr.f32.mxu0 0.0
      %375 = vmatmul.mubr.f32.gmra.mxu0 %v239
      %v376 = vpop.f32.mrf.mxu0
      %v377 = vadd.f32 %v199, %v376
      %v378 = vpop.f32.mrf.mxu0
      %379 = vmatprep.mubr.f32.mxu0 0.0
      %380 = vmatmul.mubr.f32.gmra.mxu0 %v242
      %v381 = vpop.f32.mrf.mxu0
      %v382 = vadd.f32 %v199, %v381
      %v383 = vpop.f32.mrf.mxu0
      %384 = vmatprep.mubr.f32.mxu0 0.0
      %385 = vmatmul.mubr.f32.gmra.mxu0 %v245
      %v386 = vpop.f32.mrf.mxu0
      %v387 = vadd.f32 %v199, %v386
      %v388 = vpop.f32.mrf.mxu0
      %389 = vmatprep.mubr.f32.mxu0 0.0
      %390 = vmatmul.mubr.f32.gmra.mxu0 %v248
      %v391 = vpop.f32.mrf.mxu0
      %v392 = vadd.f32 %v199, %v391
      %v393 = vpop.f32.mrf.mxu0
      %394 = vdwg.mxu0
      %411 = vrot.lane.b32.xlu0 %v317, 96
      %v412 = vpop.permute.xlu0 %411
      %413 = vrot.lane.b32.xlu0 %v322, 96
      %v414 = vpop.permute.xlu0 %413
      %415 = vrot.lane.b32.xlu0 %v327, 96
      %v416 = vpop.permute.xlu0 %415
      %417 = vrot.lane.b32.xlu0 %v332, 96
      %v418 = vpop.permute.xlu0 %417
      %419 = vrot.lane.b32.xlu0 %v337, 96
      %v420 = vpop.permute.xlu0 %419
      %421 = vrot.lane.b32.xlu0 %v342, 96
      %v422 = vpop.permute.xlu0 %421
      %423 = vrot.lane.b32.xlu0 %v347, 96
      %v424 = vpop.permute.xlu0 %423
      %425 = vrot.lane.b32.xlu0 %v352, 96
      %v426 = vpop.permute.xlu0 %425
      %427 = vrot.lane.b32.xlu0 %v357, 96
      %v428 = vpop.permute.xlu0 %427
      %429 = vrot.lane.b32.xlu0 %v362, 96
      %v430 = vpop.permute.xlu0 %429
      %431 = vrot.lane.b32.xlu0 %v367, 96
      %v432 = vpop.permute.xlu0 %431
      %433 = vrot.lane.b32.xlu0 %v372, 96
      %v434 = vpop.permute.xlu0 %433
      %435 = vrot.lane.b32.xlu0 %v377, 96
      %v436 = vpop.permute.xlu0 %435
      %437 = vrot.lane.b32.xlu0 %v382, 96
      %v438 = vpop.permute.xlu0 %437
      %439 = vrot.lane.b32.xlu0 %v387, 96
      %v440 = vpop.permute.xlu0 %439
      %441 = vrot.lane.b32.xlu0 %v392, 96
      %v442 = vpop.permute.xlu0 %441
      %v459 = vmul.f32 %v317, %v412
      %v460 = vmul.f32 %v322, %v414
      %v461 = vmul.f32 %v327, %v416
      %v462 = vmul.f32 %v332, %v418
      %v463 = vmul.f32 %v337, %v420
      %v464 = vmul.f32 %v342, %v422
      %v465 = vmul.f32 %v347, %v424
      %v466 = vmul.f32 %v352, %v426
      %v467 = vmul.f32 %v357, %v428
      %v468 = vmul.f32 %v362, %v430
      %v469 = vmul.f32 %v367, %v432
      %v470 = vmul.f32 %v372, %v434
      %v471 = vmul.f32 %v377, %v436
      %v472 = vmul.f32 %v382, %v438
      %v473 = vmul.f32 %v387, %v440
      %v474 = vmul.f32 %v392, %v442
      %v475 = vsel %vm201, %v459, 0.0
      %476 = vadd.xlane.f32.xlu0 %v475
      %v477 = vpop.xlane.xlu0 %476
      %v478 = vsel %vm201, %v460, 0.0
      %479 = vadd.xlane.f32.xlu0 %v478
      %v480 = vpop.xlane.xlu0 %479
      %v481 = vsel %vm201, %v461, 0.0
      %482 = vadd.xlane.f32.xlu0 %v481
      %v483 = vpop.xlane.xlu0 %482
      %v484 = vsel %vm201, %v462, 0.0
      %485 = vadd.xlane.f32.xlu0 %v484
      %v486 = vpop.xlane.xlu0 %485
      %v487 = vsel %vm201, %v463, 0.0
      %488 = vadd.xlane.f32.xlu0 %v487
      %v489 = vpop.xlane.xlu0 %488
      %v490 = vsel %vm201, %v464, 0.0
      %491 = vadd.xlane.f32.xlu0 %v490
      %v492 = vpop.xlane.xlu0 %491
      %v493 = vsel %vm201, %v465, 0.0
      %494 = vadd.xlane.f32.xlu0 %v493
      %v495 = vpop.xlane.xlu0 %494
      %v496 = vsel %vm201, %v466, 0.0
      %497 = vadd.xlane.f32.xlu0 %v496
      %v498 = vpop.xlane.xlu0 %497
      %v499 = vsel %vm201, %v467, 0.0
      %500 = vadd.xlane.f32.xlu0 %v499
      %v501 = vpop.xlane.xlu0 %500
      %v502 = vsel %vm201, %v468, 0.0
      %503 = vadd.xlane.f32.xlu0 %v502
      %v504 = vpop.xlane.xlu0 %503
      %v505 = vsel %vm201, %v469, 0.0
      %506 = vadd.xlane.f32.xlu0 %v505
      %v507 = vpop.xlane.xlu0 %506
      %v508 = vsel %vm201, %v470, 0.0
      %509 = vadd.xlane.f32.xlu0 %v508
      %v510 = vpop.xlane.xlu0 %509
      %v511 = vsel %vm201, %v471, 0.0
      %512 = vadd.xlane.f32.xlu0 %v511
      %v513 = vpop.xlane.xlu0 %512
      %v514 = vsel %vm201, %v472, 0.0
      %515 = vadd.xlane.f32.xlu0 %v514
      %v516 = vpop.xlane.xlu0 %515
      %v517 = vsel %vm201, %v473, 0.0
      %518 = vadd.xlane.f32.xlu0 %v517
      %v519 = vpop.xlane.xlu0 %518
      %v520 = vsel %vm201, %v474, 0.0
      %521 = vadd.xlane.f32.xlu0 %v520
      %v522 = vpop.xlane.xlu0 %521
      %vm523 = vcmask 7168
      %524 = vst.msk [vmem:[%s172] sm:$0xff] %vm523, %v477
      %525 = vst.msk [vmem:[%s172 + $0x8] sm:$0xff] %vm523, %v480
      %526 = vst.msk [vmem:[%s172 + $0x10] sm:$0xff] %vm523, %v483
      %527 = vst.msk [vmem:[%s172 + $0x18] sm:$0xff] %vm523, %v486
      %528 = vst.msk [vmem:[%s172 + $0x20] sm:$0xff] %vm523, %v489
      %529 = vst.msk [vmem:[%s172 + $0x28] sm:$0xff] %vm523, %v492
      %530 = vst.msk [vmem:[%s172 + $0x30] sm:$0xff] %vm523, %v495
      %531 = vst.msk [vmem:[%s172 + $0x38] sm:$0xff] %vm523, %v498
      %532 = vst.msk [vmem:[%s172 + $0x40] sm:$0xff] %vm523, %v501
      %533 = vst.msk [vmem:[%s172 + $0x48] sm:$0xff] %vm523, %v504
      %534 = vst.msk [vmem:[%s172 + $0x50] sm:$0xff] %vm523, %v507
      %535 = vst.msk [vmem:[%s172 + $0x58] sm:$0xff] %vm523, %v510
      %536 = vst.msk [vmem:[%s172 + $0x60] sm:$0xff] %vm523, %v513
      %537 = vst.msk [vmem:[%s172 + $0x68] sm:$0xff] %vm523, %v516
      %538 = vst.msk [vmem:[%s172 + $0x70] sm:$0xff] %vm523, %v519
      %539 = vst.msk [vmem:[%s172 + $0x78] sm:$0xff] %vm523, %v522
      %s540 = smul.u32 16, %s14
      %p541 = scmp.lt.s32.totalorder %s540, 31
      %s542 = scalar_select %p541, %s540, 31
      %s543 = smul.addr %s542, 8
      %s544 = scalar_lea.vmem %s3, %s543
      // Predicated region
      $region33: #{tpu_custom_call.1} parent=31 // pred_check
        %p545 = pneg %p100
      $region34: #{tpu_custom_call.1} parent=31 // pred_check_branch
        %547 = sbr.rel (%p545) target = $region36
      $region35: #{tpu_custom_call.1} parent=31 // pred_region
        %s548 = smul.u32 16, %s14
      $region36: #{tpu_custom_call.1} parent=31 // pred_fallthru
        _
    $region32: #{tpu_custom_call.1} parent=5 // pred_fallthru
      _
    %p549 = scmp.le.s32.totalorder 2, %s9
    // Predicated region
    $region37: #{tpu_custom_call.1} parent=5 // pred_check
      %p550 = pneg %p549
    $region38: #{tpu_custom_call.1} parent=5 // pred_check_branch
      %552 = sbr.rel (%p550) target = $region40
    $region39: #{tpu_custom_call.1} parent=5 // pred_region
      %s553 = ssub.s32 %s9, 2
      // Predicated region
      $region41: #{tpu_custom_call.1} parent=39 // pred_check
        %p554 = pneg %p106
      $region42: #{tpu_custom_call.1} parent=39 // pred_check_branch
        %556 = sbr.rel (%p554) target = $region44
      $region43: #{tpu_custom_call.1} parent=39 // pred_region
        %s557 = smul.u32 16, %s15
        %p558 = scmp.lt.s32.totalorder %s557, 31
        %s559 = scalar_select %p558, %s557, 31
        %s560 = smul.addr %s559, 8
        %s561 = scalar_lea.vmem %s3, %s560
      $region44: #{tpu_custom_call.1} parent=39 // pred_fallthru
        _
    $region40: #{tpu_custom_call.1} parent=5 // pred_fallthru
      _
  $region6: #{tpu_custom_call.1} parent=0 // loop_footer
    %s13 = sadd.s32 1, %s9
  $region7: #{tpu_custom_call.1} parent=0 // loop_footer_branch
    %8 = sbr.rel target = $region3
  $region8: #{tpu_custom_call.1} parent=0 // loop_exit
    _

</llo_original>
